<compile_context>
chip_gen: v7x
topology: tpu7x:2x2x1
jax: 0.10.0
libtpu: 0.0.40
codegen_flags: <defaults>
</compile_context>

<pallas_src>
import functools

import jax
import jax.numpy as jnp
from jax.experimental import pallas as pl
from jax.experimental.pallas import tpu as pltpu

LANE = 128
SUBLANE = 8


def _round_up(x: int, m: int) -> int:
    return ((x + m - 1) // m) * m


# ----------------------------------------------------------------------------- kernel
def _policy_kernel(x_ref, w1_ref, b1_ref, w2_ref, b2_ref, wh_ref, bh_ref,
                   masks_ref, out_ref):
    # Shared trunk: Linear -> ReLU -> Linear -> ReLU.
    # bf16 MXU inputs, f32 accumulation; bias add / ReLU in f32.
    x = x_ref[...].astype(jnp.bfloat16)                                    # (tb, S) cast in-kernel
    h1 = jnp.dot(x, w1_ref[...], preferred_element_type=jnp.float32) + b1_ref[...]
    h1 = jnp.maximum(h1, 0.0).astype(jnp.bfloat16)                         # (tb, Hp)
    h2 = jnp.dot(h1, w2_ref[...], preferred_element_type=jnp.float32) + b2_ref[...]
    h2 = jnp.maximum(h2, 0.0).astype(jnp.bfloat16)                         # (tb, Hp)

    # Fused actor+critic head: lanes [0, A) = logits, lane A = value,
    # lane A+1 and beyond = exact zeros (zero-padded weights & bias).
    head = jnp.dot(h2, wh_ref[...], preferred_element_type=jnp.float32) + bh_ref[...]

    # Precomputed lane masks: row 0 = additive softmax mask (0 on logit lanes,
    # -1e30 on value/pad lanes), row 1 = one-hot selector for the lse lane (A+1).
    masks = masks_ref[...]                                                 # (2, HP)
    add_mask = masks[0:1, :]
    lse_sel = masks[1:2, :]

    # Stable logsumexp over the real logit lanes only (EUP exp/log).
    masked = head + add_mask
    m = jnp.max(masked, axis=-1, keepdims=True)
    lse = m + jnp.log(jnp.sum(jnp.exp(masked - m), axis=-1, keepdims=True))

    # Single lane-dense f32 slab: logits | value | lse | zeros.
    # head[:, A+1] == 0 exactly, so adding lse * one_hot places lse without a select.
    out_ref[...] = head + lse * lse_sel


# ----------------------------------------------------------------------------- wrapper
def pack_params(p, lane: int = LANE):
    """One-time host-side packing.

    Pads hidden/out dims to `lane` lanes (128 by default; 256 can be used on v6e/v7x
    when H or A+1 land in (128, 256] to fill the 256-wide MXU), fuses the actor and
    critic heads into one matmul, casts weights to bf16 (biases stay f32), and builds
    the tiny (2, HP) lane-mask table used by the kernel.  The input (K) dim of w1 is
    deliberately NOT padded so `state` can be passed to the kernel unpadded.
    """
    S, H = p["w1"].shape
    A = p["wa"].shape[1]
    Hp = _round_up(H, lane)
    HP = _round_up(A + 2, lane)                       # logits | value | lse | zero pad

    bf16, f32 = jnp.bfloat16, jnp.float32
    w1 = jnp.zeros((S, Hp), bf16).at[:, :H].set(p["w1"].astype(bf16))
    b1 = jnp.zeros((1, Hp), f32).at[:, :H].set(p["b1"].astype(f32))
    w2 = jnp.zeros((Hp, Hp), bf16).at[:H, :H].set(p["w2"].astype(bf16))
    b2 = jnp.zeros((1, Hp), f32).at[:, :H].set(p["b2"].astype(f32))

    wh_raw = jnp.concatenate([p["wa"], p["wc"]], axis=1)                   # (H, A+1)
    bh_raw = jnp.concatenate([p["ba"], p["bc"]], axis=1)                   # (1, A+1)
    wh = jnp.zeros((Hp, HP), bf16).at[:H, :A + 1].set(wh_raw.astype(bf16))
    bh = jnp.zeros((1, HP), f32).at[:, :A + 1].set(bh_raw.astype(f32))

    # Row 0: additive mask (0 on logit lanes, -1e30 elsewhere).  Row 1: lse lane one-hot.
    masks = jnp.zeros((2, HP), f32)
    masks = masks.at[0, A:].set(-1e30)
    masks = masks.at[1, A + 1].set(1.0)

    packed = dict(w1=w1, b1=b1, w2=w2, b2=b2, wh=wh, bh=bh, masks=masks)
    return packed, A


@functools.partial(jax.jit, static_argnames=("action_dim", "batch_tile"))
def agent_policy_forward(state, packed, action_dim, batch_tile=512):
    """Fused actor-critic forward.

    Args:
      state:  (B, state_dim) float32 -- passed to the kernel unpadded and uncast.
      packed: output of pack_params().
      action_dim: number of real actions (static).
    Returns:
      (logits (B, A), log_probs (B, A), value (B, 1)) -- all float32.
    """
    B, S = state.shape
    Hp = packed["w2"].shape[0]
    HP = packed["wh"].shape[1]
    A = action_dim

    # --- batch tiling ------------------------------------------------------------
    # One tile for small/medium B (1-TC chips pay no extra grid-step overhead);
    # large batches split into >=2 tiles of >=512 rows, which is where v7x's second
    # TensorCore helps and which keeps every tile comfortably inside v7x's 64 MiB VMEM.
    B8 = _round_up(max(B, SUBLANE), SUBLANE)
    tb = min(_round_up(batch_tile, SUBLANE), B8)
    grid = (pl.cdiv(B, tb),)

    batch_map = lambda i: (i, 0)
    rep_map = lambda i: (0, 0)

    weight_bytes = (packed["w1"].size + packed["w2"].size + packed["wh"].size) * 2 \
                 + (packed["b1"].size + packed["b2"].size + packed["bh"].size
                    + packed["masks"].size) * 4

    cost = pl.CostEstimate(
        flops=2 * B * (S * Hp + Hp * Hp + Hp * HP),
        transcendentals=B * (HP + 1),
        bytes_accessed=B * S * 4 + weight_bytes + B * HP * 4,
    )

    # VMEM budget: double-buffered input + output, double-buffered (constant-index)
    # weights, and the live f32 intermediates; capped at 48 MiB (safe on v7x's 64 MiB).
    vmem_need = (2 * tb * S * 4          # state tiles (f32, double-buffered)
                 + 2 * tb * HP * 4       # output slab (f32, double-buffered)
                 + 2 * weight_bytes      # weights/biases/masks
                 + 4 * tb * Hp * 4)      # h1/h2/head intermediates + slack
    vmem_limit = int(min(max(2 * vmem_need, 32 * 1024 * 1024), 48 * 1024 * 1024))

    # TODO(synk): once H grows large, single-buffer the constant weight operands
    # (pl.Buffered(1) / VMEM-scratch hoist) to reclaim half their resident VMEM;
    # at Hp=128 the saving is negligible so it is omitted here.
    slab = pl.pallas_call(
        _policy_kernel,
        out_shape=jax.ShapeDtypeStruct((B, HP), jnp.float32),   # logits | value | lse | 0
        grid_spec=pltpu.PrefetchScalarGridSpec(
            num_scalar_prefetch=0,
            grid=grid,
            in_specs=[
                pl.BlockSpec((tb, S), batch_map),      # state tile (f32, full-K)
                pl.BlockSpec((S, Hp), rep_map),        # w1 (bf16, K unpadded)
                pl.BlockSpec((1, Hp), rep_map),        # b1 (f32)
                pl.BlockSpec((Hp, Hp), rep_map),       # w2 (bf16)
                pl.BlockSpec((1, Hp), rep_map),        # b2 (f32)
                pl.BlockSpec((Hp, HP), rep_map),       # fused head weight (bf16)
                pl.BlockSpec((1, HP), rep_map),        # fused head bias (f32)
                pl.BlockSpec((2, HP), rep_map),        # lane masks (f32)
            ],
            out_specs=pl.BlockSpec((tb, HP), batch_map),
        ),
        compiler_params=pltpu.CompilerParams(
            dimension_semantics=("parallel",),
            vmem_limit_bytes=vmem_limit),
        cost_estimate=cost,
    )(state, packed["w1"], packed["b1"], packed["w2"], packed["b2"],
      packed["wh"], packed["bh"], packed["masks"])

    logits = slab[:, :A]
    value = slab[:, A:A + 1]
    lse = slab[:, A + 1:A + 2]
    log_probs = logits - lse           # fuses with the slices above
    return logits, log_probs, value


# ----------------------------------------------------------------------------- params / reference
def init_params(key, state_dim, action_dim, hidden_dim):
    """Mimics nn.Linear default init (uniform +-1/sqrt(fan_in)); weights stored (in, out)."""
    ks = jax.random.split(key, 8)

    def lin(kw, kb, fan_in, fan_out):
        bound = 1.0 / jnp.sqrt(fan_in)
        w = jax.random.uniform(kw, (fan_in, fan_out), jnp.float32, -bound, bound)
        b = jax.random.uniform(kb, (1, fan_out), jnp.float32, -bound, bound)
        return w, b

    w1, b1 = lin(ks[0], ks[1], state_dim, hidden_dim)
    w2, b2 = lin(ks[2], ks[3], hidden_dim, hidden_dim)
    wa, ba = lin(ks[4], ks[5], hidden_dim, action_dim)
    wc, bc = lin(ks[6], ks[7], hidden_dim, 1)
    return dict(w1=w1, b1=b1, w2=w2, b2=b2, wa=wa, ba=ba, wc=wc, bc=bc)


def _reference(state, p):
    """Pure-JAX reference mirroring the kernel's bf16-matmul / f32-accumulate recipe."""
    f32, bf16 = jnp.float32, jnp.bfloat16
    xb = state.astype(bf16)
    h1 = jnp.maximum(jnp.dot(xb, p["w1"].astype(bf16), preferred_element_type=f32) + p["b1"], 0.0)
    h2 = jnp.maximum(jnp.dot(h1.astype(bf16), p["w2"].astype(bf16),
                             preferred_element_type=f32) + p["b2"], 0.0)
    h2b = h2.astype(bf16)
    logits = jnp.dot(h2b, p["wa"].astype(bf16), preferred_element_type=f32) + p["ba"]
    logp = jax.nn.log_softmax(logits, axis=-1)
    value = jnp.dot(h2b, p["wc"].astype(bf16), preferred_element_type=f32) + p["bc"]
    return logits, logp, value


# TODO(synk): Categorical sampling / entropy (get_action_and_value, evaluate_actions) are
# left to the caller; the kernel returns logits + log-probs + value, which fully determine
# the distribution.

if __name__ == "__main__":
    key = jax.random.PRNGKey(0)
    k_state, k_param = jax.random.split(key)

    batch, state_dim, action_dim, hidden_dim = 8, 32, 16, 32
    state = jax.random.normal(k_state, (batch, state_dim), jnp.float32)
    params = init_params(k_param, state_dim, action_dim, hidden_dim)
    packed, a_dim = pack_params(params)

    logits, log_probs, value = agent_policy_forward(state, packed, a_dim)
    jax.block_until_ready((logits, log_probs, value))

    # Cross-check against plain-JAX reference in the same bf16/f32 precision regime.
    ref_logits, ref_logp, ref_value = _reference(state, params)
    assert logits.shape == (batch, action_dim)
    assert log_probs.shape == (batch, action_dim)
    assert value.shape == (batch, 1)
    assert jnp.allclose(logits, ref_logits, atol=2e-2, rtol=2e-2)
    assert jnp.allclose(log_probs, ref_logp, atol=2e-2, rtol=2e-2)
    assert jnp.allclose(value, ref_value, atol=2e-2, rtol=2e-2)

    print("KERNEL_OK")
</pallas_src>

<mosaic_0001>
module attributes {stable_mosaic.version = 11 : i64} {
  func.func @_policy_kernel(%arg0: i32, %arg1: memref<8x32xf32, #tpu.memory_space<vmem>>, %arg2: memref<32x128xbf16, #tpu.memory_space<vmem>>, %arg3: memref<1x128xf32, #tpu.memory_space<vmem>>, %arg4: memref<128x128xbf16, #tpu.memory_space<vmem>>, %arg5: memref<1x128xf32, #tpu.memory_space<vmem>>, %arg6: memref<128x128xbf16, #tpu.memory_space<vmem>>, %arg7: memref<1x128xf32, #tpu.memory_space<vmem>>, %arg8: memref<2x128xf32, #tpu.memory_space<vmem>>, %arg9: memref<8x128xf32, #tpu.memory_space<vmem>>) attributes {dimension_semantics = [#tpu.dimension_semantics<parallel>], iteration_bounds = array<i64: 1>, scalar_prefetch = 0 : i64, scratch_operands = 0 : i64, tpu.core_type = #tpu.core_type<tc>, window_params = [{transform_indices = @transform_0, window_bounds = array<i64: 8, 32>}, {pipeline_mode = #tpu.pipeline_mode<synchronous>, transform_indices = @transform_1, window_bounds = array<i64: 32, 128>}, {pipeline_mode = #tpu.pipeline_mode<synchronous>, transform_indices = @transform_2, window_bounds = array<i64: 1, 128>}, {pipeline_mode = #tpu.pipeline_mode<synchronous>, transform_indices = @transform_3, window_bounds = array<i64: 128, 128>}, {pipeline_mode = #tpu.pipeline_mode<synchronous>, transform_indices = @transform_4, window_bounds = array<i64: 1, 128>}, {pipeline_mode = #tpu.pipeline_mode<synchronous>, transform_indices = @transform_5, window_bounds = array<i64: 128, 128>}, {pipeline_mode = #tpu.pipeline_mode<synchronous>, transform_indices = @transform_6, window_bounds = array<i64: 1, 128>}, {pipeline_mode = #tpu.pipeline_mode<synchronous>, transform_indices = @transform_7, window_bounds = array<i64: 2, 128>}, {transform_indices = @transform_8, window_bounds = array<i64: 8, 128>}]} {
    %c0 = arith.constant 0 : index
    %c0_0 = arith.constant 0 : index
    %0 = vector.load %arg1[%c0, %c0_0] : memref<8x32xf32, #tpu.memory_space<vmem>>, vector<8x32xf32>
    %1 = arith.truncf %0 : vector<8x32xf32> to vector<8x32xbf16>
    %c0_1 = arith.constant 0 : index
    %c0_2 = arith.constant 0 : index
    %2 = vector.load %arg2[%c0_1, %c0_2] : memref<32x128xbf16, #tpu.memory_space<vmem>>, vector<32x128xbf16>
    %cst = arith.constant dense<0.000000e+00> : vector<8x128xf32>
    %3 = tpu.matmul %1, %2, %cst {dimension_numbers = #tpu.dot_dimension_numbers<[1], [0], [0], [1], [0, 0, 1, 1], [], []>} : vector<8x32xbf16>, vector<32x128xbf16>, vector<8x128xf32> -> vector<8x128xf32>
    %c0_3 = arith.constant 0 : index
    %c0_4 = arith.constant 0 : index
    %4 = vector.load %arg3[%c0_3, %c0_4] : memref<1x128xf32, #tpu.memory_space<vmem>>, vector<1x128xf32>
    %5 = vector.broadcast %4 : vector<1x128xf32> to vector<8x128xf32>
    %6 = arith.addf %3, %5 : vector<8x128xf32>
    %cst_5 = arith.constant 0.000000e+00 : f32
    %7 = vector.broadcast %cst_5 : f32 to vector<8x128xf32>
    %8 = arith.maximumf %6, %7 : vector<8x128xf32>
    %9 = arith.truncf %8 : vector<8x128xf32> to vector<8x128xbf16>
    %c0_6 = arith.constant 0 : index
    %c0_7 = arith.constant 0 : index
    %10 = vector.load %arg4[%c0_6, %c0_7] : memref<128x128xbf16, #tpu.memory_space<vmem>>, vector<128x128xbf16>
    %cst_8 = arith.constant dense<0.000000e+00> : vector<8x128xf32>
    %11 = tpu.matmul %9, %10, %cst_8 {dimension_numbers = #tpu.dot_dimension_numbers<[1], [0], [0], [1], [0, 0, 1, 1], [], []>} : vector<8x128xbf16>, vector<128x128xbf16>, vector<8x128xf32> -> vector<8x128xf32>
    %c0_9 = arith.constant 0 : index
    %c0_10 = arith.constant 0 : index
    %12 = vector.load %arg5[%c0_9, %c0_10] : memref<1x128xf32, #tpu.memory_space<vmem>>, vector<1x128xf32>
    %13 = vector.broadcast %12 : vector<1x128xf32> to vector<8x128xf32>
    %14 = arith.addf %11, %13 : vector<8x128xf32>
    %cst_11 = arith.constant 0.000000e+00 : f32
    %15 = vector.broadcast %cst_11 : f32 to vector<8x128xf32>
    %16 = arith.maximumf %14, %15 : vector<8x128xf32>
    %17 = arith.truncf %16 : vector<8x128xf32> to vector<8x128xbf16>
    %c0_12 = arith.constant 0 : index
    %c0_13 = arith.constant 0 : index
    %18 = vector.load %arg6[%c0_12, %c0_13] : memref<128x128xbf16, #tpu.memory_space<vmem>>, vector<128x128xbf16>
    %cst_14 = arith.constant dense<0.000000e+00> : vector<8x128xf32>
    %19 = tpu.matmul %17, %18, %cst_14 {dimension_numbers = #tpu.dot_dimension_numbers<[1], [0], [0], [1], [0, 0, 1, 1], [], []>} : vector<8x128xbf16>, vector<128x128xbf16>, vector<8x128xf32> -> vector<8x128xf32>
    %c0_15 = arith.constant 0 : index
    %c0_16 = arith.constant 0 : index
    %20 = vector.load %arg7[%c0_15, %c0_16] : memref<1x128xf32, #tpu.memory_space<vmem>>, vector<1x128xf32>
    %21 = vector.broadcast %20 : vector<1x128xf32> to vector<8x128xf32>
    %22 = arith.addf %19, %21 : vector<8x128xf32>
    %c0_17 = arith.constant 0 : index
    %c0_18 = arith.constant 0 : index
    %23 = vector.load %arg8[%c0_17, %c0_18] : memref<2x128xf32, #tpu.memory_space<vmem>>, vector<2x128xf32>
    %24 = vector.extract_strided_slice %23 {offsets = [0, 0], sizes = [1, 128], strides = [1, 1]} : vector<2x128xf32> to vector<1x128xf32>
    %25 = vector.extract_strided_slice %23 {offsets = [1, 0], sizes = [1, 128], strides = [1, 1]} : vector<2x128xf32> to vector<1x128xf32>
    %26 = vector.broadcast %24 : vector<1x128xf32> to vector<8x128xf32>
    %27 = arith.addf %22, %26 : vector<8x128xf32>
    %cst_19 = arith.constant dense<0xFF800000> : vector<8xf32>
    %28 = vector.multi_reduction <maximumf>, %27, %cst_19 [1] : vector<8x128xf32> to vector<8xf32>
    %29 = vector.shape_cast %28 : vector<8xf32> to vector<8x1xf32>
    %30 = vector.broadcast %29 : vector<8x1xf32> to vector<8x128xf32>
    %31 = arith.subf %27, %30 : vector<8x128xf32>
    %32 = math.exp %31 : vector<8x128xf32>
    %cst_20 = arith.constant dense<0.000000e+00> : vector<8xf32>
    %33 = vector.multi_reduction <add>, %32, %cst_20 [1] : vector<8x128xf32> to vector<8xf32>
    %34 = vector.shape_cast %33 : vector<8xf32> to vector<8x1xf32>
    %35 = math.log %34 : vector<8x1xf32>
    %36 = arith.addf %29, %35 : vector<8x1xf32>
    %37 = vector.broadcast %36 : vector<8x1xf32> to vector<8x128xf32>
    %38 = vector.broadcast %25 : vector<1x128xf32> to vector<8x128xf32>
    %39 = arith.mulf %37, %38 : vector<8x128xf32>
    %40 = arith.addf %22, %39 : vector<8x128xf32>
    %c0_21 = arith.constant 0 : index
    %c0_22 = arith.constant 0 : index
    %41 = vector.load %arg9[%c0_21, %c0_22] : memref<8x128xf32, #tpu.memory_space<vmem>>, vector<8x128xf32>
    tpu.vector_store %arg9[%c0_21, %c0_22], %40 {strides = array<i32>} : memref<8x128xf32, #tpu.memory_space<vmem>>, vector<8x128xf32>,
    return
  }
  func.func @transform_0(%arg0: i32) -> (i32, i32) {
    %c0_i32 = arith.constant 0 : i32
    %c0_i32_0 = arith.constant 0 : i32
    return %arg0, %c0_i32 : i32, i32
  }
  func.func @transform_1(%arg0: i32) -> (i32, i32) {
    %c0_i32 = arith.constant 0 : i32
    %c0_i32_0 = arith.constant 0 : i32
    %c0_i32_1 = arith.constant 0 : i32
    return %c0_i32, %c0_i32_0 : i32, i32
  }
  func.func @transform_2(%arg0: i32) -> (i32, i32) {
    %c0_i32 = arith.constant 0 : i32
    %c0_i32_0 = arith.constant 0 : i32
    %c0_i32_1 = arith.constant 0 : i32
    return %c0_i32, %c0_i32_0 : i32, i32
  }
  func.func @transform_3(%arg0: i32) -> (i32, i32) {
    %c0_i32 = arith.constant 0 : i32
    %c0_i32_0 = arith.constant 0 : i32
    %c0_i32_1 = arith.constant 0 : i32
    return %c0_i32, %c0_i32_0 : i32, i32
  }
  func.func @transform_4(%arg0: i32) -> (i32, i32) {
    %c0_i32 = arith.constant 0 : i32
    %c0_i32_0 = arith.constant 0 : i32
    %c0_i32_1 = arith.constant 0 : i32
    return %c0_i32, %c0_i32_0 : i32, i32
  }
  func.func @transform_5(%arg0: i32) -> (i32, i32) {
    %c0_i32 = arith.constant 0 : i32
    %c0_i32_0 = arith.constant 0 : i32
    %c0_i32_1 = arith.constant 0 : i32
    return %c0_i32, %c0_i32_0 : i32, i32
  }
  func.func @transform_6(%arg0: i32) -> (i32, i32) {
    %c0_i32 = arith.constant 0 : i32
    %c0_i32_0 = arith.constant 0 : i32
    %c0_i32_1 = arith.constant 0 : i32
    return %c0_i32, %c0_i32_0 : i32, i32
  }
  func.func @transform_7(%arg0: i32) -> (i32, i32) {
    %c0_i32 = arith.constant 0 : i32
    %c0_i32_0 = arith.constant 0 : i32
    %c0_i32_1 = arith.constant 0 : i32
    return %c0_i32, %c0_i32_0 : i32, i32
  }
  func.func @transform_8(%arg0: i32) -> (i32, i32) {
    %c0_i32 = arith.constant 0 : i32
    %c0_i32_0 = arith.constant 0 : i32
    return %arg0, %c0_i32 : i32, i32
  }
}

</mosaic_0001>

<llo_original>
// kernel: agent_policy_forward.1
$region0: #{agent_policy_forward.1}
  #allocation0 [shape = 'u32[]', space=smem, size = 0x4, offset = 0x4, fixed_abs, tag = 'smem constant byte address 0x4 - core index']
  #allocation1 [shape = 'u32[144,128]{1,0:T(1,128)}', space=vmem, size = 0x12000, scoped, tag = 'internal scratch']
  %s0 = inlined_call_operand.hbm [shape: f32[8,32], index: 0, kind: input, shape index: {}]
  %s1 = inlined_call_operand.vmem [shape: bf16[32,128], index: 1, kind: input, shape index: {}]
  %s2 = inlined_call_operand.hbm [shape: f32[1,128], index: 2, kind: input, shape index: {}]
  %s3 = inlined_call_operand.hbm [shape: bf16[128,128], index: 3, kind: input, shape index: {}]
  %s4 = inlined_call_operand.hbm [shape: f32[1,128], index: 4, kind: input, shape index: {}]
  %s5 = inlined_call_operand.hbm [shape: bf16[128,128], index: 5, kind: input, shape index: {}]
  %s6 = inlined_call_operand.hbm [shape: f32[1,128], index: 6, kind: input, shape index: {}]
  %s7 = inlined_call_operand.vmem [shape: f32[2,128], index: 7, kind: input, shape index: {}]
  %s8 = inlined_call_operand.vmem [shape: f32[8,128], index: 8, kind: output, shape index: {}]
  %s9 = sld [smem:[#allocation0]]
  $region66: #{agent_policy_forward.1} parent=0
    _
  %s11 = ssub.s32 1, %s9
  %s12 = scalar_select 0, %s11, %s9
  $region1: #{agent_policy_forward.1} parent=0
    #allocation2 [shape = 'u8[4096]{0}', space=vmem, size = 0x1000, scoped, tag = 'input window, operand 0, single buffered']
    #allocation3 [shape = 's32[1]{0}', space=sflag, size = 0x4, scoped, tag = 'scoped memory for agent_policy_forward.1']
    #allocation4 [shape = 'u8[512]{0}', space=vmem, size = 0x400, scoped, tag = 'input window, operand 2, single buffered']
    #allocation5 [shape = 's32[1]{0}', space=sflag, size = 0x4, scoped, tag = 'scoped memory for agent_policy_forward.1']
    #allocation6 [shape = 'u8[32768]{0}', space=vmem, size = 0x8000, scoped, tag = 'input window, operand 3, single buffered']
    #allocation7 [shape = 'u8[512]{0}', space=vmem, size = 0x400, scoped, tag = 'input window, operand 4, single buffered']
    #allocation8 [shape = 's32[1]{0}', space=sflag, size = 0x4, scoped, tag = 'scoped memory for agent_policy_forward.1']
    #allocation9 [shape = 'u8[32768]{0}', space=vmem, size = 0x8000, scoped, tag = 'input window, operand 5, single buffered']
    #allocation10 [shape = 'u8[512]{0}', space=vmem, size = 0x400, scoped, tag = 'input window, operand 6, single buffered']
    #allocation11 [shape = 's32[1]{0}', space=sflag, size = 0x4, scoped, tag = 'scoped memory for agent_policy_forward.1']
    %13 = vsyncpa [#allocation3], 0
    %14 = vsyncpa [#allocation5], 0
    %15 = vsyncpa [#allocation8], 0
    %16 = vsyncpa [#allocation11], 0
    // Predicated region
    $region2: #{agent_policy_forward.1} parent=1 // pred_check
      _
    $region3: #{agent_policy_forward.1} parent=1 // pred_check_branch
      %18 = sbr.rel (0) target = $region5
    $region4: #{agent_policy_forward.1} parent=1 // pred_region
      %s20 = ssub.s32 128, 128
      %21 = vsyncadd [#allocation3], %s20
      %s23 = sshll.u32 [#allocation2], 4
      %s24 = int_to_ptr.vmem [resolvable:$true] %s23
      %26 = dma.hbm_to_vmem [thread:$0]  %s0, 128, %s24, [#allocation3]
    $region5: #{agent_policy_forward.1} parent=1 // pred_fallthru
      _
    // Predicated region
    $region6: #{agent_policy_forward.1} parent=1 // pred_check
      _
    $region7: #{agent_policy_forward.1} parent=1 // pred_check_branch
      %28 = sbr.rel (0) target = $region9
    $region8: #{agent_policy_forward.1} parent=1 // pred_region
      _
    $region9: #{agent_policy_forward.1} parent=1 // pred_fallthru
      _
    // Predicated region
    $region10: #{agent_policy_forward.1} parent=1 // pred_check
      _
    $region11: #{agent_policy_forward.1} parent=1 // pred_check_branch
      %30 = sbr.rel (0) target = $region13
    $region12: #{agent_policy_forward.1} parent=1 // pred_region
      %s32 = ssub.s32 16, 16
      %33 = vsyncadd [#allocation5], %s32
      %s35 = sshll.u32 [#allocation4], 4
      %s36 = int_to_ptr.vmem [resolvable:$true] %s35
      %38 = dma.hbm_to_vmem [thread:$0]  %s2, 16, %s36, [#allocation5]
    $region13: #{agent_policy_forward.1} parent=1 // pred_fallthru
      _
    // Predicated region
    $region14: #{agent_policy_forward.1} parent=1 // pred_check
      _
    $region15: #{agent_policy_forward.1} parent=1 // pred_check_branch
      %40 = sbr.rel (0) target = $region17
    $region16: #{agent_policy_forward.1} parent=1 // pred_region
      %s42 = ssub.s32 1024, 1024
      %43 = vsyncadd [#allocation5], %s42
      %s44 = sshll.u32 [#allocation6], 4
      %s45 = int_to_ptr.vmem [resolvable:$true] %s44
      %50 = dma.hbm_to_vmem [thread:$0]  %s3, 1024, %s45, [#allocation5], 64, 64, 4
    $region17: #{agent_policy_forward.1} parent=1 // pred_fallthru
      _
    // Predicated region
    $region18: #{agent_policy_forward.1} parent=1 // pred_check
      _
    $region19: #{agent_policy_forward.1} parent=1 // pred_check_branch
      %52 = sbr.rel (0) target = $region21
    $region20: #{agent_policy_forward.1} parent=1 // pred_region
      %s54 = ssub.s32 16, 16
      %55 = vsyncadd [#allocation8], %s54
      %s57 = sshll.u32 [#allocation7], 4
      %s58 = int_to_ptr.vmem [resolvable:$true] %s57
      %60 = dma.hbm_to_vmem [thread:$0]  %s4, 16, %s58, [#allocation8]
    $region21: #{agent_policy_forward.1} parent=1 // pred_fallthru
      _
    // Predicated region
    $region22: #{agent_policy_forward.1} parent=1 // pred_check
      _
    $region23: #{agent_policy_forward.1} parent=1 // pred_check_branch
      %62 = sbr.rel (0) target = $region25
    $region24: #{agent_policy_forward.1} parent=1 // pred_region
      %s64 = ssub.s32 1024, 1024
      %65 = vsyncadd [#allocation8], %s64
      %s66 = sshll.u32 [#allocation9], 4
      %s67 = int_to_ptr.vmem [resolvable:$true] %s66
      %72 = dma.hbm_to_vmem [thread:$0]  %s5, 1024, %s67, [#allocation8], 64, 64, 4
    $region25: #{agent_policy_forward.1} parent=1 // pred_fallthru
      _
    // Predicated region
    $region26: #{agent_policy_forward.1} parent=1 // pred_check
      _
    $region27: #{agent_policy_forward.1} parent=1 // pred_check_branch
      %74 = sbr.rel (0) target = $region29
    $region28: #{agent_policy_forward.1} parent=1 // pred_region
      %s76 = ssub.s32 16, 16
      %77 = vsyncadd [#allocation11], %s76
      %s79 = sshll.u32 [#allocation10], 4
      %s80 = int_to_ptr.vmem [resolvable:$true] %s79
      %82 = dma.hbm_to_vmem [thread:$0]  %s6, 16, %s80, [#allocation11]
    $region29: #{agent_policy_forward.1} parent=1 // pred_fallthru
      _
    // Predicated region
    $region30: #{agent_policy_forward.1} parent=1 // pred_check
      _
    $region31: #{agent_policy_forward.1} parent=1 // pred_check_branch
      %84 = sbr.rel (0) target = $region33
    $region32: #{agent_policy_forward.1} parent=1 // pred_region
      _
    $region33: #{agent_policy_forward.1} parent=1 // pred_fallthru
      _
    // Predicated region
    $region34: #{agent_policy_forward.1} parent=1 // pred_check
      _
    $region35: #{agent_policy_forward.1} parent=1 // pred_check_branch
      %86 = sbr.rel (0) target = $region37
    $region36: #{agent_policy_forward.1} parent=1 // pred_region
      %87 = dma.done [#allocation3], 128
    $region37: #{agent_policy_forward.1} parent=1 // pred_fallthru
      _
    // Predicated region
    $region38: #{agent_policy_forward.1} parent=1 // pred_check
      _
    $region39: #{agent_policy_forward.1} parent=1 // pred_check_branch
      %89 = sbr.rel (0) target = $region41
    $region40: #{agent_policy_forward.1} parent=1 // pred_region
      %90 = dma.done [#allocation5], 16
    $region41: #{agent_policy_forward.1} parent=1 // pred_fallthru
      _
    // Predicated region
    $region42: #{agent_policy_forward.1} parent=1 // pred_check
      _
    $region43: #{agent_policy_forward.1} parent=1 // pred_check_branch
      %92 = sbr.rel (0) target = $region45
    $region44: #{agent_policy_forward.1} parent=1 // pred_region
      %93 = dma.done [#allocation5], 1024
    $region45: #{agent_policy_forward.1} parent=1 // pred_fallthru
      _
    // Predicated region
    $region46: #{agent_policy_forward.1} parent=1 // pred_check
      _
    $region47: #{agent_policy_forward.1} parent=1 // pred_check_branch
      %95 = sbr.rel (0) target = $region49
    $region48: #{agent_policy_forward.1} parent=1 // pred_region
      %96 = dma.done [#allocation8], 16
    $region49: #{agent_policy_forward.1} parent=1 // pred_fallthru
      _
    // Predicated region
    $region50: #{agent_policy_forward.1} parent=1 // pred_check
      _
    $region51: #{agent_policy_forward.1} parent=1 // pred_check_branch
      %98 = sbr.rel (0) target = $region53
    $region52: #{agent_policy_forward.1} parent=1 // pred_region
      %99 = dma.done [#allocation8], 1024
    $region53: #{agent_policy_forward.1} parent=1 // pred_fallthru
      _
    // Predicated region
    $region54: #{agent_policy_forward.1} parent=1 // pred_check
      _
    $region55: #{agent_policy_forward.1} parent=1 // pred_check_branch
      %101 = sbr.rel (0) target = $region57
    $region56: #{agent_policy_forward.1} parent=1 // pred_region
      %102 = dma.done [#allocation11], 16
    $region57: #{agent_policy_forward.1} parent=1 // pred_fallthru
      _
    %v104 = vld [vmem:[#allocation2] sm:$0xff]
    %v105 = vpack.c.bf16 %v104, %v104
    %v106 = vld [vmem:[%s1] sm:$0xf]
    %v107 = vld [vmem:[%s1 + $0x4] sm:$0xf]
    %v108 = vld [vmem:[%s1 + $0x8] sm:$0xf]
    %v109 = vld [vmem:[%s1 + $0xc] sm:$0xf]
    %v110 = vld [vmem:[#allocation4] sm:$0x1]
    %v112 = vlaneseq
    %v113 = vshrl.u32 %v112, 7
    %v114 = vsub.s32 0, %v113
    %v115 = vrot.slane %v110, %v114
    %v121 = vunpack.c.l.b16 %v106
    %v122 = vunpack.c.l.b16 %v107
    %v123 = vunpack.c.l.b16 %v108
    %v124 = vunpack.c.l.b16 %v109
    %v125 = vpack.c.b16 %v122, %v121
    %v126 = vpack.c.b16 %v124, %v123
    %vm129 = vcmask 261120
    %v131 = vsel %vm129, %v105, 0
    %133 = vmatprep.subr.bf16.mxu0 0
    %134 = vmatpush1.bf16.msra.mxu0 %v125
    %135 = vmatprep.subr.bf16.mxu0 0
    %136 = vmatpush1.bf16.msra.mxu0 %v126
    %137 = vmatprep.subr.bf16.mxu0 0
    %138 = vmatpush1.bf16.msra.mxu0 0
    %139 = vmatprep.subr.bf16.mxu0 0
    %140 = vmatpush1.bf16.msra.mxu0 0
    %141 = vmatprep.subr.bf16.mxu0 0
    %142 = vmatpush1.bf16.msra.mxu0 0
    %143 = vmatprep.subr.bf16.mxu0 0
    %144 = vmatpush1.bf16.msra.mxu0 0
    %145 = vmatprep.subr.bf16.mxu0 0
    %146 = vmatpush1.bf16.msra.mxu0 0
    %147 = vmatprep.subr.bf16.mxu0 0
    %148 = vmatpush1.bf16.msra.mxu0 0
    %149 = vmatprep.subr.bf16.mxu0 0
    %150 = vmatpush1.bf16.msra.mxu0 0
    %151 = vmatprep.subr.bf16.mxu0 0
    %152 = vmatpush1.bf16.msra.mxu0 0
    %153 = vmatprep.subr.bf16.mxu0 0
    %154 = vmatpush1.bf16.msra.mxu0 0
    %155 = vmatprep.subr.bf16.mxu0 0
    %156 = vmatpush1.bf16.msra.mxu0 0
    %157 = vmatprep.subr.bf16.mxu0 0
    %158 = vmatpush1.bf16.msra.mxu0 0
    %159 = vmatprep.subr.bf16.mxu0 0
    %160 = vmatpush1.bf16.msra.mxu0 0
    %161 = vmatprep.subr.bf16.mxu0 0
    %162 = vmatpush1.bf16.msra.mxu0 0
    %163 = vmatprep.subr.bf16.mxu0 0
    %164 = vmatpush1.bf16.msra.mxu0 0
    %165 = vmatprep.mubr.bf16.mxu0 0
    %166 = vmatmul.mubr.bf16.gmra.mrb[0].mxu0 %v131
    %v167 = vpop.f32.mrb[0].mxu0
    %v168 = vadd.f32 %v115, %v167
    %v169 = vpop.f32.mrb[0].mxu0
    %v170 = vpop.f32.mrb[0].mxu0
    %v171 = vpop.f32.mrb[0].mxu0
    %172 = vdwg.mxu0
    %v173 = vmax.f32 %v168, 0.0
    %v174 = vpack.c.bf16 %v173, %v173
    %v175 = vld [vmem:[#allocation6] sm:$0xf]
    %v176 = vld [vmem:[#allocation6 + $0x4] sm:$0xf]
    %v177 = vld [vmem:[#allocation6 + $0x8] sm:$0xf]
    %v178 = vld [vmem:[#allocation6 + $0xc] sm:$0xf]
    %v179 = vld [vmem:[#allocation6 + $0x10] sm:$0xf]
    %v180 = vld [vmem:[#allocation6 + $0x14] sm:$0xf]
    %v181 = vld [vmem:[#allocation6 + $0x18] sm:$0xf]
    %v182 = vld [vmem:[#allocation6 + $0x1c] sm:$0xf]
    %v183 = vld [vmem:[#allocation6 + $0x20] sm:$0xf]
    %v184 = vld [vmem:[#allocation6 + $0x24] sm:$0xf]
    %v185 = vld [vmem:[#allocation6 + $0x28] sm:$0xf]
    %v186 = vld [vmem:[#allocation6 + $0x2c] sm:$0xf]
    %v187 = vld [vmem:[#allocation6 + $0x30] sm:$0xf]
    %v188 = vld [vmem:[#allocation6 + $0x34] sm:$0xf]
    %v189 = vld [vmem:[#allocation6 + $0x38] sm:$0xf]
    %v190 = vld [vmem:[#allocation6 + $0x3c] sm:$0xf]
    %v191 = vld [vmem:[#allocation7] sm:$0x1]
    %v193 = vlaneseq
    %v194 = vshrl.u32 %v193, 7
    %v195 = vsub.s32 0, %v194
    %v196 = vrot.slane %v191, %v195
    %v214 = vunpack.c.l.b16 %v175
    %v215 = vunpack.c.l.b16 %v176
    %v216 = vunpack.c.l.b16 %v177
    %v217 = vunpack.c.l.b16 %v178
    %v218 = vunpack.c.l.b16 %v179
    %v219 = vunpack.c.l.b16 %v180
    %v220 = vunpack.c.l.b16 %v181
    %v221 = vunpack.c.l.b16 %v182
    %v222 = vunpack.c.l.b16 %v183
    %v223 = vunpack.c.l.b16 %v184
    %v224 = vunpack.c.l.b16 %v185
    %v225 = vunpack.c.l.b16 %v186
    %v226 = vunpack.c.l.b16 %v187
    %v227 = vunpack.c.l.b16 %v188
    %v228 = vunpack.c.l.b16 %v189
    %v229 = vunpack.c.l.b16 %v190
    %v230 = vpack.c.b16 %v215, %v214
    %v231 = vpack.c.b16 %v217, %v216
    %v232 = vpack.c.b16 %v219, %v218
    %v233 = vpack.c.b16 %v221, %v220
    %v234 = vpack.c.b16 %v223, %v222
    %v235 = vpack.c.b16 %v225, %v224
    %v236 = vpack.c.b16 %v227, %v226
    %v237 = vpack.c.b16 %v229, %v228
    %246 = vmatprep.subr.bf16.mxu0 0
    %247 = vmatpush1.bf16.msra.mxu0 %v230
    %248 = vmatprep.subr.bf16.mxu0 0
    %249 = vmatpush1.bf16.msra.mxu0 %v231
    %250 = vmatprep.subr.bf16.mxu0 0
    %251 = vmatpush1.bf16.msra.mxu0 %v232
    %252 = vmatprep.subr.bf16.mxu0 0
    %253 = vmatpush1.bf16.msra.mxu0 %v233
    %254 = vmatprep.subr.bf16.mxu0 0
    %255 = vmatpush1.bf16.msra.mxu0 %v234
    %256 = vmatprep.subr.bf16.mxu0 0
    %257 = vmatpush1.bf16.msra.mxu0 %v235
    %258 = vmatprep.subr.bf16.mxu0 0
    %259 = vmatpush1.bf16.msra.mxu0 %v236
    %260 = vmatprep.subr.bf16.mxu0 0
    %261 = vmatpush1.bf16.msra.mxu0 %v237
    %262 = vmatprep.subr.bf16.mxu0 0
    %263 = vmatpush1.bf16.msra.mxu0 0
    %264 = vmatprep.subr.bf16.mxu0 0
    %265 = vmatpush1.bf16.msra.mxu0 0
    %266 = vmatprep.subr.bf16.mxu0 0
    %267 = vmatpush1.bf16.msra.mxu0 0
    %268 = vmatprep.subr.bf16.mxu0 0
    %269 = vmatpush1.bf16.msra.mxu0 0
    %270 = vmatprep.subr.bf16.mxu0 0
    %271 = vmatpush1.bf16.msra.mxu0 0
    %272 = vmatprep.subr.bf16.mxu0 0
    %273 = vmatpush1.bf16.msra.mxu0 0
    %274 = vmatprep.subr.bf16.mxu0 0
    %275 = vmatpush1.bf16.msra.mxu0 0
    %276 = vmatprep.subr.bf16.mxu0 0
    %277 = vmatpush1.bf16.msra.mxu0 0
    %278 = vmatprep.mubr.bf16.mxu0 0
    %279 = vmatmul.mubr.bf16.gmra.mrb[0].mxu0 %v174
    %v280 = vpop.f32.mrb[0].mxu0
    %v281 = vadd.f32 %v196, %v280
    %v282 = vpop.f32.mrb[0].mxu0
    %v283 = vpop.f32.mrb[0].mxu0
    %v284 = vpop.f32.mrb[0].mxu0
    %285 = vdwg.mxu0
    %v286 = vmax.f32 %v281, 0.0
    %v287 = vpack.c.bf16 %v286, %v286
    %v288 = vld [vmem:[#allocation9] sm:$0xf]
    %v289 = vld [vmem:[#allocation9 + $0x4] sm:$0xf]
    %v290 = vld [vmem:[#allocation9 + $0x8] sm:$0xf]
    %v291 = vld [vmem:[#allocation9 + $0xc] sm:$0xf]
    %v292 = vld [vmem:[#allocation9 + $0x10] sm:$0xf]
    %v293 = vld [vmem:[#allocation9 + $0x14] sm:$0xf]
    %v294 = vld [vmem:[#allocation9 + $0x18] sm:$0xf]
    %v295 = vld [vmem:[#allocation9 + $0x1c] sm:$0xf]
    %v296 = vld [vmem:[#allocation9 + $0x20] sm:$0xf]
    %v297 = vld [vmem:[#allocation9 + $0x24] sm:$0xf]
    %v298 = vld [vmem:[#allocation9 + $0x28] sm:$0xf]
    %v299 = vld [vmem:[#allocation9 + $0x2c] sm:$0xf]
    %v300 = vld [vmem:[#allocation9 + $0x30] sm:$0xf]
    %v301 = vld [vmem:[#allocation9 + $0x34] sm:$0xf]
    %v302 = vld [vmem:[#allocation9 + $0x38] sm:$0xf]
    %v303 = vld [vmem:[#allocation9 + $0x3c] sm:$0xf]
    %v304 = vld [vmem:[#allocation10] sm:$0x1]
    %v306 = vlaneseq
    %v307 = vshrl.u32 %v306, 7
    %v308 = vsub.s32 0, %v307
    %v309 = vrot.slane %v304, %v308
    %v327 = vunpack.c.l.b16 %v288
    %v328 = vunpack.c.l.b16 %v289
    %v329 = vunpack.c.l.b16 %v290
    %v330 = vunpack.c.l.b16 %v291
    %v331 = vunpack.c.l.b16 %v292
    %v332 = vunpack.c.l.b16 %v293
    %v333 = vunpack.c.l.b16 %v294
    %v334 = vunpack.c.l.b16 %v295
    %v335 = vunpack.c.l.b16 %v296
    %v336 = vunpack.c.l.b16 %v297
    %v337 = vunpack.c.l.b16 %v298
    %v338 = vunpack.c.l.b16 %v299
    %v339 = vunpack.c.l.b16 %v300
    %v340 = vunpack.c.l.b16 %v301
    %v341 = vunpack.c.l.b16 %v302
    %v342 = vunpack.c.l.b16 %v303
    %v343 = vpack.c.b16 %v328, %v327
    %v344 = vpack.c.b16 %v330, %v329
    %v345 = vpack.c.b16 %v332, %v331
    %v346 = vpack.c.b16 %v334, %v333
    %v347 = vpack.c.b16 %v336, %v335
    %v348 = vpack.c.b16 %v338, %v337
    %v349 = vpack.c.b16 %v340, %v339
    %v350 = vpack.c.b16 %v342, %v341
    %359 = vmatprep.subr.bf16.mxu0 0
    %360 = vmatpush1.bf16.msra.mxu0 %v343
    %361 = vmatprep.subr.bf16.mxu0 0
    %362 = vmatpush1.bf16.msra.mxu0 %v344
    %363 = vmatprep.subr.bf16.mxu0 0
    %364 = vmatpush1.bf16.msra.mxu0 %v345
    %365 = vmatprep.subr.bf16.mxu0 0
    %366 = vmatpush1.bf16.msra.mxu0 %v346
    %367 = vmatprep.subr.bf16.mxu0 0
    %368 = vmatpush1.bf16.msra.mxu0 %v347
    %369 = vmatprep.subr.bf16.mxu0 0
    %370 = vmatpush1.bf16.msra.mxu0 %v348
    %371 = vmatprep.subr.bf16.mxu0 0
    %372 = vmatpush1.bf16.msra.mxu0 %v349
    %373 = vmatprep.subr.bf16.mxu0 0
    %374 = vmatpush1.bf16.msra.mxu0 %v350
    %375 = vmatprep.subr.bf16.mxu0 0
    %376 = vmatpush1.bf16.msra.mxu0 0
    %377 = vmatprep.subr.bf16.mxu0 0
    %378 = vmatpush1.bf16.msra.mxu0 0
    %379 = vmatprep.subr.bf16.mxu0 0
    %380 = vmatpush1.bf16.msra.mxu0 0
    %381 = vmatprep.subr.bf16.mxu0 0
    %382 = vmatpush1.bf16.msra.mxu0 0
    %383 = vmatprep.subr.bf16.mxu0 0
    %384 = vmatpush1.bf16.msra.mxu0 0
    %385 = vmatprep.subr.bf16.mxu0 0
    %386 = vmatpush1.bf16.msra.mxu0 0
    %387 = vmatprep.subr.bf16.mxu0 0
    %388 = vmatpush1.bf16.msra.mxu0 0
    %389 = vmatprep.subr.bf16.mxu0 0
    %390 = vmatpush1.bf16.msra.mxu0 0
    %391 = vmatprep.mubr.bf16.mxu0 0
    %392 = vmatmul.mubr.bf16.gmra.mrb[0].mxu0 %v287
    %v393 = vpop.f32.mrb[0].mxu0
    %v394 = vadd.f32 %v309, %v393
    %v395 = vpop.f32.mrb[0].mxu0
    %v396 = vpop.f32.mrb[0].mxu0
    %v397 = vpop.f32.mrb[0].mxu0
    %398 = vdwg.mxu0
    %v399 = vld [vmem:[%s7] sm:$0x3]
    %v400 = vlaneseq
    %v401 = vshrl.u32 %v400, 7
    %v402 = vsub.s32 0, %v401
    %v403 = vrot.slane %v399, %v402
    %v404 = vadd.f32 %v394, %v403
    %405 = vmax.xlane.f32.xlu0 %v404
    %v406 = vpop.xlane.xlu0 %405
    %v407 = vsub.f32 %v404, %v406
    %v408 = vmul.f32 %v407, 1.442695
    %v409 = vpow.pop %v408
    %410 = vadd.xlane.f32.xlu0 %v409
    %v411 = vpop.xlane.xlu0 %410
    %v412 = vlog2.pop %v411
    %v413 = vmul.f32 %v412, 0.6931472
    %v414 = vadd.f32 %v406, %v413
    %v415 = vlaneseq
    %v416 = vshrl.u32 %v415, 7
    %v417 = vsub.s32 1, %v416
    %v418 = vrot.slane %v399, %v417
    %v419 = vmul.f32 %v414, %v418
    %v420 = vadd.f32 %v394, %v419
    %421 = vst [vmem:[%s8] sm:$0xff] %v420
    // Predicated region
    $region58: #{agent_policy_forward.1} parent=1 // pred_check
      _
    $region59: #{agent_policy_forward.1} parent=1 // pred_check_branch
      %423 = sbr.rel (0) target = $region61
    $region60: #{agent_policy_forward.1} parent=1 // pred_region
      _
    $region61: #{agent_policy_forward.1} parent=1 // pred_fallthru
      _
    // Predicated region
    $region62: #{agent_policy_forward.1} parent=1 // pred_check
      _
    $region63: #{agent_policy_forward.1} parent=1 // pred_check_branch
      %425 = sbr.rel (0) target = $region65
    $region64: #{agent_policy_forward.1} parent=1 // pred_region
      _
    $region65: #{agent_policy_forward.1} parent=1 // pred_fallthru
      _
    %426 = vsyncpa [#allocation3], 1
    %427 = vsyncpa [#allocation5], 1
    %428 = vsyncpa [#allocation8], 1
    %429 = vsyncpa [#allocation11], 1

</llo_original>
